<compile_context>
chip_gen: v6e
topology: v6e:2x2x1
jax: 0.10.0
libtpu: 0.0.40
codegen_flags: <defaults>
</compile_context>

<pallas_src>
import functools

import jax
import jax.numpy as jnp
from jax.experimental import pallas as pl
from jax.experimental.pallas import tpu as pltpu


def _round_up(x, m):
    return (x + m - 1) // m * m


def _cdiv(a, b):
    return (a + b - 1) // b


# ---------------------------------------------------------------------------
# Kernel body: h = x @ W + b + residual ; out = LN(h)
# ---------------------------------------------------------------------------
def _dense_residual_ln_kernel(x_ref, res_ref, w_ref, b_ref, g_ref, beta_ref,
                              o_ref, *, eps, hout):
    # x_ref: [TR, Hin]   res_ref: [TR, Hout]   w_ref: [Hin, Hout]
    # b_ref/g_ref/beta_ref: [1, Hout]          o_ref: [TR, Hout]
    mm_dtype = w_ref.dtype  # bf16 (MXU native rate) or f32; accumulate in f32.
    h = jnp.dot(x_ref[...].astype(mm_dtype), w_ref[...],
                preferred_element_type=jnp.float32)
    h = h + b_ref[...].astype(jnp.float32) + res_ref[...].astype(jnp.float32)

    # One-pass LayerNorm statistics: the two reductions are independent
    # (shorter VPU/XLU critical path than mean -> center -> var).
    inv_n = jnp.float32(1.0 / hout)
    s1 = jnp.sum(h, axis=-1, keepdims=True)
    s2 = jnp.sum(h * h, axis=-1, keepdims=True)
    mean = s1 * inv_n
    var = jnp.maximum(s2 * inv_n - mean * mean, 0.0)
    inv = jax.lax.rsqrt(var + eps)

    o_ref[...] = ((h - mean) * inv * g_ref[...].astype(jnp.float32)
                  + beta_ref[...].astype(jnp.float32)).astype(o_ref.dtype)


# ---------------------------------------------------------------------------
# VMEM budgeting + pallas_call wrapper (operates on flattened [rows, H] views)
# ---------------------------------------------------------------------------
_VMEM_TARGET_BYTES = 40 * 1024 * 1024   # fits the scoped window on v5e/v6e/v7x
_VMEM_HEADROOM_BYTES = 6 * 1024 * 1024
_VMEM_LIMIT_CAP = 64 * 1024 * 1024      # never ask for more than v7x physical


def _tile_vmem_bytes(tr, hin, hout, x_dt, r_dt, w_dt, o_dt):
    isz = lambda d: jnp.dtype(d).itemsize
    w = hin * hout * isz(w_dt) * 2          # weight (conservatively 2 buffers)
    x = 2 * tr * hin * isz(x_dt)            # double-buffered activation rows
    r = 2 * tr * hout * isz(r_dt)           # double-buffered residual rows
    o = 2 * tr * hout * isz(o_dt)           # double-buffered output rows
    ln = tr * hout * 4                       # f32 matmul / LN temporaries
    vecs = 3 * 2 * hout * 4                  # bias / gamma / beta
    return w + x + r + o + ln + vecs


def fused_dense_residual_layernorm(x2, r2, w_io, bias, gamma, beta, *,
                                   eps=1e-12, block_rows=512, out_dtype=None):
    """x2: [rows, Hin], r2: [rows, Hout], w_io: [Hin, Hout] (prepared layout),
    bias/gamma/beta: [1, Hout]."""
    rows, hin = x2.shape
    hout = w_io.shape[1]
    out_dtype = out_dtype or r2.dtype

    # Row tile: multiple of 8 sublanes, aim for >= 2 grid steps (keeps both
    # v7x TensorCores busy), capped by block_rows and the explicit VMEM budget.
    tr = max(8, min(_round_up(block_rows, 8), _round_up(_cdiv(rows, 2), 8)))
    while tr > 8 and _tile_vmem_bytes(tr, hin, hout, x2.dtype, r2.dtype,
                                      w_io.dtype, out_dtype) > _VMEM_TARGET_BYTES:
        tr = max(8, _round_up(tr // 2, 8))

    vmem_budget = _tile_vmem_bytes(tr, hin, hout, x2.dtype, r2.dtype,
                                   w_io.dtype, out_dtype)
    vmem_limit = int(min(max(vmem_budget + _VMEM_HEADROOM_BYTES,
                             32 * 1024 * 1024), _VMEM_LIMIT_CAP))

    grid = (_cdiv(rows, tr),)  # ragged last tile handled by Pallas (no jnp.pad)

    isz = lambda d: jnp.dtype(d).itemsize
    bytes_accessed = (rows * hin * isz(x2.dtype)
                      + rows * hout * isz(r2.dtype)
                      + hin * hout * isz(w_io.dtype)
                      + rows * hout * isz(out_dtype)
                      + 3 * hout * 4)
    cost = pl.CostEstimate(flops=2 * rows * hin * hout,
                           transcendentals=0,
                           bytes_accessed=int(bytes_accessed))

    return pl.pallas_call(
        functools.partial(_dense_residual_ln_kernel, eps=eps, hout=hout),
        out_shape=jax.ShapeDtypeStruct((rows, hout), out_dtype),
        grid_spec=pltpu.PrefetchScalarGridSpec(
            num_scalar_prefetch=0,
            grid=grid,
            in_specs=[
                pl.BlockSpec((tr, hin), lambda i: (i, 0)),     # x rows (pipelined)
                pl.BlockSpec((tr, hout), lambda i: (i, 0)),    # residual rows
                pl.BlockSpec((hin, hout), lambda i: (0, 0)),   # weight (VMEM-resident)
                pl.BlockSpec((1, hout), lambda i: (0, 0)),     # bias
                pl.BlockSpec((1, hout), lambda i: (0, 0)),     # LN gamma
                pl.BlockSpec((1, hout), lambda i: (0, 0)),     # LN beta
            ],
            out_specs=pl.BlockSpec((tr, hout), lambda i: (i, 0)),
        ),
        compiler_params=pltpu.CompilerParams(
            dimension_semantics=("parallel",),
            vmem_limit_bytes=vmem_limit),
        cost_estimate=cost,
    )(x2, r2, w_io, bias, gamma, beta)


# ---------------------------------------------------------------------------
# Parameter preparation (one-time; removes the per-call weight transpose)
# ---------------------------------------------------------------------------
def prepare_stream_params(dense_w, dense_b, ln_gamma, ln_beta, *,
                          weight_dtype=jnp.bfloat16):
    """dense_w is in PyTorch layout [Hout, Hin]; converted once to [Hin, Hout]."""
    hout = dense_w.shape[0]
    return {
        "w_io": jnp.asarray(dense_w).T.astype(weight_dtype),          # [Hin, Hout]
        "b": jnp.asarray(dense_b).reshape(1, hout).astype(jnp.float32),
        "gamma": jnp.asarray(ln_gamma).reshape(1, hout).astype(jnp.float32),
        "beta": jnp.asarray(ln_beta).reshape(1, hout).astype(jnp.float32),
    }


# ---------------------------------------------------------------------------
# Module forward
# ---------------------------------------------------------------------------
def bert_gated_self_output(t_hidden_states, v_hidden_states,
                           t_input_tensor, v_input_tensor,
                           t_params=None, v_params=None, *,
                           has_language=True, has_vision=True,
                           share_layer=False, eps=1e-12, block_rows=512):
    """Forward pass of BertGatedSelfOutput (single_ln is covered by share_layer:
    a shared LayerNorm over the concatenated streams equals per-stream LN)."""
    t_out = v_out = None

    if not has_language:
        # dense / dropout / LayerNorm are identity lambdas in the module,
        # so the residual add still happens (hidden is typically the int 0).
        t_out = t_hidden_states + t_input_tensor
    if not has_vision:
        v_out = v_hidden_states + v_input_tensor

    if has_language and has_vision and share_layer:
        # One launch / one weight DMA: the (typically tiny) vision rows ride
        # along in the text stream's grid.  (Worth it when the extra stream is
        # small relative to launch + weight-DMA overhead, the common case.)
        p = t_params
        B, S, hin = t_hidden_states.shape
        _, NB, hin_v = v_hidden_states.shape
        hout = p["w_io"].shape[1]
        x2 = jnp.concatenate([t_hidden_states.reshape(B * S, hin),
                              v_hidden_states.reshape(B * NB, hin_v)], axis=0)
        r2 = jnp.concatenate([t_input_tensor.reshape(B * S, hout),
                              v_input_tensor.reshape(B * NB, hout)], axis=0)
        out = fused_dense_residual_layernorm(
            x2, r2, p["w_io"], p["b"], p["gamma"], p["beta"],
            eps=eps, block_rows=block_rows, out_dtype=t_input_tensor.dtype)
        t_out = out[:B * S].reshape(B, S, hout)
        v_out = out[B * S:].reshape(B, NB, hout)
        return t_out, v_out

    if has_language:
        p = t_params
        B, S, hin = t_hidden_states.shape
        hout = p["w_io"].shape[1]
        t_out = fused_dense_residual_layernorm(
            t_hidden_states.reshape(B * S, hin),
            t_input_tensor.reshape(B * S, hout),
            p["w_io"], p["b"], p["gamma"], p["beta"],
            eps=eps, block_rows=block_rows,
            out_dtype=t_input_tensor.dtype).reshape(B, S, hout)
    if has_vision:
        p = v_params
        B, NB, hin = v_hidden_states.shape
        hout = p["w_io"].shape[1]
        v_out = fused_dense_residual_layernorm(
            v_hidden_states.reshape(B * NB, hin),
            v_input_tensor.reshape(B * NB, hout),
            p["w_io"], p["b"], p["gamma"], p["beta"],
            eps=eps, block_rows=block_rows,
            out_dtype=v_input_tensor.dtype).reshape(B, NB, hout)
    return t_out, v_out


# ---------------------------------------------------------------------------
# Test
# ---------------------------------------------------------------------------
if __name__ == "__main__":
    # Small shapes consistent with the module: batch=2, seq_len=8, num_box=4,
    # hidden_size=32, v_hidden_size=32.
    B, seq_len, num_box, hidden, v_hidden = 2, 8, 4, 32, 32
    eps = 1e-12

    key = jax.random.PRNGKey(0)
    ks = jax.random.split(key, 10)

    t_hs = jax.random.normal(ks[0], (B, seq_len, hidden), jnp.float32)
    v_hs = jax.random.normal(ks[1], (B, num_box, v_hidden), jnp.float32)
    t_in = jax.random.normal(ks[2], (B, seq_len, hidden), jnp.float32)
    v_in = jax.random.normal(ks[3], (B, num_box, v_hidden), jnp.float32)

    t_w = jax.random.normal(ks[4], (hidden, hidden), jnp.float32) * 0.02
    t_b = jax.random.normal(ks[5], (hidden,), jnp.float32) * 0.02
    t_g = jnp.ones((hidden,), jnp.float32)
    t_be = jnp.zeros((hidden,), jnp.float32)
    v_w = jax.random.normal(ks[6], (v_hidden, v_hidden), jnp.float32) * 0.02
    v_b = jax.random.normal(ks[7], (v_hidden,), jnp.float32) * 0.02
    v_g = 1.0 + 0.1 * jax.random.normal(ks[8], (v_hidden,), jnp.float32)
    v_be = 0.1 * jax.random.normal(ks[9], (v_hidden,), jnp.float32)

    # Pure-JAX reference (f32, matches PyTorch eval-mode forward).
    def ref_ln(z, g, b):
        u = z.mean(-1, keepdims=True)
        s = ((z - u) ** 2).mean(-1, keepdims=True)
        return g * (z - u) / jnp.sqrt(s + eps) + b

    t_ref = ref_ln(t_hs @ t_w.T + t_b + t_in, t_g, t_be)
    v_ref = ref_ln(v_hs @ v_w.T + v_b + v_in, v_g, v_be)
    v_ref_shared = ref_ln(v_hs @ t_w.T + t_b + v_in, t_g, t_be)

    # --- Config 1: separate (non-shared) streams, bf16 matmul datapath -------
    t_params_bf16 = prepare_stream_params(t_w, t_b, t_g, t_be,
                                          weight_dtype=jnp.bfloat16)
    v_params_bf16 = prepare_stream_params(v_w, v_b, v_g, v_be,
                                          weight_dtype=jnp.bfloat16)
    t_out, v_out = bert_gated_self_output(
        t_hs, v_hs, t_in, v_in, t_params_bf16, v_params_bf16,
        has_language=True, has_vision=True, share_layer=False, eps=eps)
    t_out, v_out = jax.block_until_ready((t_out, v_out))
    assert t_out.shape == (B, seq_len, hidden)
    assert v_out.shape == (B, num_box, v_hidden)
    # bf16 weights/matmul -> relaxed tolerance vs the f32 reference.
    assert jnp.allclose(t_out, t_ref, atol=2e-2, rtol=2e-2)
    assert jnp.allclose(v_out, v_ref, atol=2e-2, rtol=2e-2)

    # --- Config 2: shared layer (covers single_ln), f32 weights, merged call --
    t_params_f32 = prepare_stream_params(t_w, t_b, t_g, t_be,
                                         weight_dtype=jnp.float32)
    t_out2, v_out2 = bert_gated_self_output(
        t_hs, v_hs, t_in, v_in, t_params_f32, None,
        has_language=True, has_vision=True, share_layer=True, eps=eps)
    t_out2, v_out2 = jax.block_until_ready((t_out2, v_out2))
    assert t_out2.shape == (B, seq_len, hidden)
    assert v_out2.shape == (B, num_box, v_hidden)
    assert jnp.allclose(t_out2, t_ref, atol=1e-4, rtol=1e-4)
    assert jnp.allclose(v_out2, v_ref_shared, atol=1e-4, rtol=1e-4)

    print("KERNEL_OK")
</pallas_src>

<mosaic_0001>
module attributes {stable_mosaic.version = 11 : i64} {
  func.func @_dense_residual_ln_kernel(%arg0: i32, %arg1: memref<8x32xf32, #tpu.memory_space<vmem>>, %arg2: memref<8x32xf32, #tpu.memory_space<vmem>>, %arg3: memref<32x32xbf16, #tpu.memory_space<vmem>>, %arg4: memref<1x32xf32, #tpu.memory_space<vmem>>, %arg5: memref<1x32xf32, #tpu.memory_space<vmem>>, %arg6: memref<1x32xf32, #tpu.memory_space<vmem>>, %arg7: memref<8x32xf32, #tpu.memory_space<vmem>>) attributes {dimension_semantics = [#tpu.dimension_semantics<parallel>], iteration_bounds = array<i64: 2>, scalar_prefetch = 0 : i64, scratch_operands = 0 : i64, tpu.core_type = #tpu.core_type<tc>, window_params = [{transform_indices = @transform_0, window_bounds = array<i64: 8, 32>}, {transform_indices = @transform_1, window_bounds = array<i64: 8, 32>}, {pipeline_mode = #tpu.pipeline_mode<synchronous>, transform_indices = @transform_2, window_bounds = array<i64: 32, 32>}, {pipeline_mode = #tpu.pipeline_mode<synchronous>, transform_indices = @transform_3, window_bounds = array<i64: 1, 32>}, {pipeline_mode = #tpu.pipeline_mode<synchronous>, transform_indices = @transform_4, window_bounds = array<i64: 1, 32>}, {pipeline_mode = #tpu.pipeline_mode<synchronous>, transform_indices = @transform_5, window_bounds = array<i64: 1, 32>}, {transform_indices = @transform_6, window_bounds = array<i64: 8, 32>}]} {
    %c0 = arith.constant 0 : index
    %c0_0 = arith.constant 0 : index
    %0 = vector.load %arg1[%c0, %c0_0] : memref<8x32xf32, #tpu.memory_space<vmem>>, vector<8x32xf32>
    %1 = arith.truncf %0 : vector<8x32xf32> to vector<8x32xbf16>
    %c0_1 = arith.constant 0 : index
    %c0_2 = arith.constant 0 : index
    %2 = vector.load %arg3[%c0_1, %c0_2] : memref<32x32xbf16, #tpu.memory_space<vmem>>, vector<32x32xbf16>
    %cst = arith.constant dense<0.000000e+00> : vector<8x32xf32>
    %3 = tpu.matmul %1, %2, %cst {dimension_numbers = #tpu.dot_dimension_numbers<[1], [0], [0], [1], [0, 0, 1, 1], [], []>} : vector<8x32xbf16>, vector<32x32xbf16>, vector<8x32xf32> -> vector<8x32xf32>
    %c0_3 = arith.constant 0 : index
    %c0_4 = arith.constant 0 : index
    %4 = vector.load %arg4[%c0_3, %c0_4] : memref<1x32xf32, #tpu.memory_space<vmem>>, vector<1x32xf32>
    %5 = vector.broadcast %4 : vector<1x32xf32> to vector<8x32xf32>
    %6 = arith.addf %3, %5 : vector<8x32xf32>
    %c0_5 = arith.constant 0 : index
    %c0_6 = arith.constant 0 : index
    %7 = vector.load %arg2[%c0_5, %c0_6] : memref<8x32xf32, #tpu.memory_space<vmem>>, vector<8x32xf32>
    %8 = arith.addf %6, %7 : vector<8x32xf32>
    %cst_7 = arith.constant dense<0.000000e+00> : vector<8xf32>
    %9 = vector.multi_reduction <add>, %8, %cst_7 [1] : vector<8x32xf32> to vector<8xf32>
    %10 = vector.shape_cast %9 : vector<8xf32> to vector<8x1xf32>
    %11 = arith.mulf %8, %8 : vector<8x32xf32>
    %cst_8 = arith.constant dense<0.000000e+00> : vector<8xf32>
    %12 = vector.multi_reduction <add>, %11, %cst_8 [1] : vector<8x32xf32> to vector<8xf32>
    %13 = vector.shape_cast %12 : vector<8xf32> to vector<8x1xf32>
    %cst_9 = arith.constant 3.125000e-02 : f32
    %14 = vector.broadcast %cst_9 : f32 to vector<8x1xf32>
    %15 = arith.mulf %10, %14 : vector<8x1xf32>
    %cst_10 = arith.constant 3.125000e-02 : f32
    %16 = vector.broadcast %cst_10 : f32 to vector<8x1xf32>
    %17 = arith.mulf %13, %16 : vector<8x1xf32>
    %18 = arith.mulf %15, %15 : vector<8x1xf32>
    %19 = arith.subf %17, %18 : vector<8x1xf32>
    %cst_11 = arith.constant 0.000000e+00 : f32
    %20 = vector.broadcast %cst_11 : f32 to vector<8x1xf32>
    %21 = arith.maximumf %19, %20 : vector<8x1xf32>
    %cst_12 = arith.constant 9.99999996E-13 : f32
    %22 = vector.broadcast %cst_12 : f32 to vector<8x1xf32>
    %23 = arith.addf %21, %22 : vector<8x1xf32>
    %24 = math.rsqrt %23 : vector<8x1xf32>
    %25 = vector.broadcast %15 : vector<8x1xf32> to vector<8x32xf32>
    %26 = arith.subf %8, %25 : vector<8x32xf32>
    %27 = vector.broadcast %24 : vector<8x1xf32> to vector<8x32xf32>
    %28 = arith.mulf %26, %27 : vector<8x32xf32>
    %c0_13 = arith.constant 0 : index
    %c0_14 = arith.constant 0 : index
    %29 = vector.load %arg5[%c0_13, %c0_14] : memref<1x32xf32, #tpu.memory_space<vmem>>, vector<1x32xf32>
    %30 = vector.broadcast %29 : vector<1x32xf32> to vector<8x32xf32>
    %31 = arith.mulf %28, %30 : vector<8x32xf32>
    %c0_15 = arith.constant 0 : index
    %c0_16 = arith.constant 0 : index
    %32 = vector.load %arg6[%c0_15, %c0_16] : memref<1x32xf32, #tpu.memory_space<vmem>>, vector<1x32xf32>
    %33 = vector.broadcast %32 : vector<1x32xf32> to vector<8x32xf32>
    %34 = arith.addf %31, %33 : vector<8x32xf32>
    %c0_17 = arith.constant 0 : index
    %c0_18 = arith.constant 0 : index
    %35 = vector.load %arg7[%c0_17, %c0_18] : memref<8x32xf32, #tpu.memory_space<vmem>>, vector<8x32xf32>
    tpu.vector_store %arg7[%c0_17, %c0_18], %34 {strides = array<i32>} : memref<8x32xf32, #tpu.memory_space<vmem>>, vector<8x32xf32>,
    return
  }
  func.func @transform_0(%arg0: i32) -> (i32, i32) {
    %c0_i32 = arith.constant 0 : i32
    %c0_i32_0 = arith.constant 0 : i32
    return %arg0, %c0_i32 : i32, i32
  }
  func.func @transform_1(%arg0: i32) -> (i32, i32) {
    %c0_i32 = arith.constant 0 : i32
    %c0_i32_0 = arith.constant 0 : i32
    return %arg0, %c0_i32 : i32, i32
  }
  func.func @transform_2(%arg0: i32) -> (i32, i32) {
    %c0_i32 = arith.constant 0 : i32
    %c0_i32_0 = arith.constant 0 : i32
    %c0_i32_1 = arith.constant 0 : i32
    return %c0_i32, %c0_i32_0 : i32, i32
  }
  func.func @transform_3(%arg0: i32) -> (i32, i32) {
    %c0_i32 = arith.constant 0 : i32
    %c0_i32_0 = arith.constant 0 : i32
    %c0_i32_1 = arith.constant 0 : i32
    return %c0_i32, %c0_i32_0 : i32, i32
  }
  func.func @transform_4(%arg0: i32) -> (i32, i32) {
    %c0_i32 = arith.constant 0 : i32
    %c0_i32_0 = arith.constant 0 : i32
    %c0_i32_1 = arith.constant 0 : i32
    return %c0_i32, %c0_i32_0 : i32, i32
  }
  func.func @transform_5(%arg0: i32) -> (i32, i32) {
    %c0_i32 = arith.constant 0 : i32
    %c0_i32_0 = arith.constant 0 : i32
    %c0_i32_1 = arith.constant 0 : i32
    return %c0_i32, %c0_i32_0 : i32, i32
  }
  func.func @transform_6(%arg0: i32) -> (i32, i32) {
    %c0_i32 = arith.constant 0 : i32
    %c0_i32_0 = arith.constant 0 : i32
    return %arg0, %c0_i32 : i32, i32
  }
}

</mosaic_0001>

<llo_original>
// kernel: tpu_custom_call.1
$region0: #{tpu_custom_call.1}
  #allocation0 [shape = 'u32[]', space=smem, size = 0x4, offset = 0x4, fixed_abs, tag = 'smem constant byte address 0x4 - core index']
  #allocation1 [shape = 'u32[144,128]{1,0:T(1,128)}', space=vmem, size = 0x12000, scoped, tag = 'internal scratch']
  %s0 = inlined_call_operand.hbm [shape: f32[16,32], index: 0, kind: input, shape index: {}]
  %s1 = inlined_call_operand.hbm [shape: f32[16,32], index: 1, kind: input, shape index: {}]
  %s2 = inlined_call_operand.hbm [shape: bf16[32,32], index: 2, kind: input, shape index: {}]
  %s3 = inlined_call_operand.vmem [shape: f32[1,32], index: 3, kind: input, shape index: {}]
  %s4 = inlined_call_operand.vmem [shape: f32[1,32], index: 4, kind: input, shape index: {}]
  %s5 = inlined_call_operand.vmem [shape: f32[1,32], index: 5, kind: input, shape index: {}]
  %s6 = inlined_call_operand.hbm [shape: f32[16,32], index: 6, kind: output, shape index: {}]
  %s7 = sld [smem:[#allocation0]]
  $region69: #{tpu_custom_call.1} parent=0
    _
  %s9 = ssub.s32 1, %s7
  %s10 = scalar_select 0, %s9, %s7
  $region1: #{tpu_custom_call.1} parent=0
    #allocation2 [shape = 'u8[8192]{0}', space=vmem, size = 0x2000, scoped, tag = 'input window, operand 0']
    #allocation3 [shape = 's32[2]{0}', space=sflag, size = 0x8, scoped, tag = 'scoped memory for tpu_custom_call.1']
    #allocation4 [shape = 's32[2]{0}', space=sflag, size = 0x8, scoped, tag = 'scoped memory for tpu_custom_call.1']
    #allocation5 [shape = 'u8[8192]{0}', space=vmem, size = 0x2000, scoped, tag = 'input window, operand 1']
    #allocation6 [shape = 's32[2]{0}', space=sflag, size = 0x8, scoped, tag = 'scoped memory for tpu_custom_call.1']
    #allocation7 [shape = 'u8[8192]{0}', space=vmem, size = 0x2000, scoped, tag = 'input window, operand 2, single buffered']
    #allocation8 [shape = 'u8[8192]{0}', space=vmem, size = 0x2000, scoped, tag = 'output window, operand 0']
    %11 = vsyncpa [#allocation3], 0
    %s12 = scalar_lea.sflag [#allocation3], 1
    %13 = vsyncpa %s12, 0
    %14 = vsyncpa [#allocation6], 0
    %s15 = scalar_lea.sflag [#allocation6], 1
    %16 = vsyncpa %s15, 0
    %17 = vsyncpa [#allocation4], 0
    %s18 = scalar_lea.sflag [#allocation4], 1
    %19 = vsyncpa %s18, 0
    loop: start=0, step=1, limit=4
    $region2: #{tpu_custom_call.1} parent=1 // loop_pre_header
      _
    $region3: #{tpu_custom_call.1} parent=1 // loop_header
      %s21 = sphi 0, %s25
      %p22 = scmp.ge.s32.totalorder %s21, 4
      %s31 = sphi 0, %s33
      %s34 = sphi 0, %s31
      %s35 = sphi 0, %s34
      %s51 = sphi 0, %s35
      %s57 = sphi 0, %s59
      %s60 = sphi 0, %s57
      %s61 = sphi 0, %s60
      %s77 = sphi 0, %s61
      %s81 = sphi 0, %s81
      %s83 = sphi 0, %s81
      %s84 = sphi 0, %s83
      %s98 = sphi 0, %s84
      %s102 = sphi 0, %s102
      %s104 = sphi 0, %s102
      %s105 = sphi 0, %s104
      %s119 = sphi 0, %s105
      %s123 = sphi 0, %s123
      %s125 = sphi 0, %s123
      %s126 = sphi 0, %s125
      %s140 = sphi 0, %s126
      %s144 = sphi 0, %s144
      %s146 = sphi 0, %s144
      %s147 = sphi 0, %s146
      %s161 = sphi 0, %s147
      %s167 = sphi 0, %s169
      %s170 = sphi 0, %s167
      %s171 = sphi 0, %s170
      %s187 = sphi 0, %s171
    $region4: #{tpu_custom_call.1} parent=1 // loop_header_branch
      %24 = sbr.rel (%p22) target = $region8
    $region5: #{tpu_custom_call.1} parent=1 // loop_body
      %s26 = ssub.s32 %s21, 1
      %s27 = ssub.s32 %s21, 2
      %s28 = sadd.s32 %s21, 1
      %s29 = ssub.s32 %s21, %s28
      %p30 = scmp.eq.s32.totalorder %s29, 0
      %s32 = sadd.s32 %s31, 1
      %s33 = scalar_select %p30, %s31, %s32
      %p36 = pneg %p30
      %p37 = scmp.eq.s32.totalorder %s21, 1
      %p38 = por %p36, %p37
      %p39 = scmp.ne.s32.totalorder %s31, %s34
      %p40 = scmp.eq.s32.totalorder %s21, 0
      %p41 = por %p39, %p40
      %p42 = scmp.ne.s32.totalorder %s31, %s34
      %p43 = scmp.eq.s32.totalorder %s26, 1
      %p44 = por %p42, %p43
      %p45 = scmp.ne.s32.totalorder %s34, %s35
      %p46 = scmp.eq.s32.totalorder %s26, 0
      %p47 = por %p45, %p46
      %p48 = scmp.ne.s32.totalorder %s34, %s35
      %p49 = scmp.eq.s32.totalorder %s27, 1
      %p50 = por %p48, %p49
      %p52 = scmp.ne.s32.totalorder %s35, %s51
      %p53 = scmp.eq.s32.totalorder %s27, 0
      %p54 = por %p52, %p53
      %s55 = ssub.s32 %s21, %s28
      %p56 = scmp.eq.s32.totalorder %s55, 0
      %s58 = sadd.s32 %s57, 1
      %s59 = scalar_select %p56, %s57, %s58
      %p62 = pneg %p56
      %p63 = scmp.eq.s32.totalorder %s21, 1
      %p64 = por %p62, %p63
      %p65 = scmp.ne.s32.totalorder %s57, %s60
      %p66 = scmp.eq.s32.totalorder %s21, 0
      %p67 = por %p65, %p66
      %p68 = scmp.ne.s32.totalorder %s57, %s60
      %p69 = scmp.eq.s32.totalorder %s26, 1
      %p70 = por %p68, %p69
      %p71 = scmp.ne.s32.totalorder %s60, %s61
      %p72 = scmp.eq.s32.totalorder %s26, 0
      %p73 = por %p71, %p72
      %p74 = scmp.ne.s32.totalorder %s60, %s61
      %p75 = scmp.eq.s32.totalorder %s27, 1
      %p76 = por %p74, %p75
      %p78 = scmp.ne.s32.totalorder %s61, %s77
      %p79 = scmp.eq.s32.totalorder %s27, 0
      %p80 = por %p78, %p79
      %s82 = sadd.s32 %s81, 1
      %p85 = scmp.eq.s32.totalorder %s21, 1
      %p86 = scmp.ne.s32.totalorder %s81, %s83
      %p87 = scmp.eq.s32.totalorder %s21, 0
      %p88 = por %p86, %p87
      %p89 = scmp.ne.s32.totalorder %s81, %s83
      %p90 = scmp.eq.s32.totalorder %s26, 1
      %p91 = por %p89, %p90
      %p92 = scmp.ne.s32.totalorder %s83, %s84
      %p93 = scmp.eq.s32.totalorder %s26, 0
      %p94 = por %p92, %p93
      %p95 = scmp.ne.s32.totalorder %s83, %s84
      %p96 = scmp.eq.s32.totalorder %s27, 1
      %p97 = por %p95, %p96
      %p99 = scmp.ne.s32.totalorder %s84, %s98
      %p100 = scmp.eq.s32.totalorder %s27, 0
      %p101 = por %p99, %p100
      %s103 = sadd.s32 %s102, 1
      %p106 = scmp.eq.s32.totalorder %s21, 1
      %p107 = scmp.ne.s32.totalorder %s102, %s104
      %p108 = scmp.eq.s32.totalorder %s21, 0
      %p109 = por %p107, %p108
      %p110 = scmp.ne.s32.totalorder %s102, %s104
      %p111 = scmp.eq.s32.totalorder %s26, 1
      %p112 = por %p110, %p111
      %p113 = scmp.ne.s32.totalorder %s104, %s105
      %p114 = scmp.eq.s32.totalorder %s26, 0
      %p115 = por %p113, %p114
      %p116 = scmp.ne.s32.totalorder %s104, %s105
      %p117 = scmp.eq.s32.totalorder %s27, 1
      %p118 = por %p116, %p117
      %p120 = scmp.ne.s32.totalorder %s105, %s119
      %p121 = scmp.eq.s32.totalorder %s27, 0
      %p122 = por %p120, %p121
      %s124 = sadd.s32 %s123, 1
      %p127 = scmp.eq.s32.totalorder %s21, 1
      %p128 = scmp.ne.s32.totalorder %s123, %s125
      %p129 = scmp.eq.s32.totalorder %s21, 0
      %p130 = por %p128, %p129
      %p131 = scmp.ne.s32.totalorder %s123, %s125
      %p132 = scmp.eq.s32.totalorder %s26, 1
      %p133 = por %p131, %p132
      %p134 = scmp.ne.s32.totalorder %s125, %s126
      %p135 = scmp.eq.s32.totalorder %s26, 0
      %p136 = por %p134, %p135
      %p137 = scmp.ne.s32.totalorder %s125, %s126
      %p138 = scmp.eq.s32.totalorder %s27, 1
      %p139 = por %p137, %p138
      %p141 = scmp.ne.s32.totalorder %s126, %s140
      %p142 = scmp.eq.s32.totalorder %s27, 0
      %p143 = por %p141, %p142
      %s145 = sadd.s32 %s144, 1
      %p148 = scmp.eq.s32.totalorder %s21, 1
      %p149 = scmp.ne.s32.totalorder %s144, %s146
      %p150 = scmp.eq.s32.totalorder %s21, 0
      %p151 = por %p149, %p150
      %p152 = scmp.ne.s32.totalorder %s144, %s146
      %p153 = scmp.eq.s32.totalorder %s26, 1
      %p154 = por %p152, %p153
      %p155 = scmp.ne.s32.totalorder %s146, %s147
      %p156 = scmp.eq.s32.totalorder %s26, 0
      %p157 = por %p155, %p156
      %p158 = scmp.ne.s32.totalorder %s146, %s147
      %p159 = scmp.eq.s32.totalorder %s27, 1
      %p160 = por %p158, %p159
      %p162 = scmp.ne.s32.totalorder %s147, %s161
      %p163 = scmp.eq.s32.totalorder %s27, 0
      %p164 = por %p162, %p163
      %s165 = ssub.s32 %s21, %s28
      %p166 = scmp.eq.s32.totalorder %s165, 0
      %s168 = sadd.s32 %s167, 1
      %s169 = scalar_select %p166, %s167, %s168
      %p172 = pneg %p166
      %p173 = scmp.eq.s32.totalorder %s21, 1
      %p174 = por %p172, %p173
      %p175 = scmp.ne.s32.totalorder %s167, %s170
      %p176 = scmp.eq.s32.totalorder %s21, 0
      %p177 = por %p175, %p176
      %p178 = scmp.ne.s32.totalorder %s167, %s170
      %p179 = scmp.eq.s32.totalorder %s26, 1
      %p180 = por %p178, %p179
      %p181 = scmp.ne.s32.totalorder %s170, %s171
      %p182 = scmp.eq.s32.totalorder %s26, 0
      %p183 = por %p181, %p182
      %p184 = scmp.ne.s32.totalorder %s170, %s171
      %p185 = scmp.eq.s32.totalorder %s27, 1
      %p186 = por %p184, %p185
      %p188 = scmp.ne.s32.totalorder %s171, %s187
      %p189 = scmp.eq.s32.totalorder %s27, 0
      %p190 = por %p188, %p189
      %p191 = scmp.le.s32.totalorder 1, %s21
      %p192 = scmp.lt.s32.totalorder %s21, 3
      %p193 = pnand %p191, %p192
      %p194 = pneg %p193
      // Predicated region
      $region9: #{tpu_custom_call.1} parent=5 // pred_check
        _
      $region10: #{tpu_custom_call.1} parent=5 // pred_check_branch
        %196 = sbr.rel (%p193) target = $region12
      $region11: #{tpu_custom_call.1} parent=5 // pred_region
        %s197 = ssub.s32 %s21, 1
        // Predicated region
        $region13: #{tpu_custom_call.1} parent=11 // pred_check
          %p198 = pneg %p94
        $region14: #{tpu_custom_call.1} parent=11 // pred_check_branch
          %200 = sbr.rel (%p198) target = $region16
        $region15: #{tpu_custom_call.1} parent=11 // pred_region
          %s202 = ssub.s32 256, 256
          %203 = vsyncadd [#allocation6], %s202
          %s204 = sshll.u32 [#allocation7], 4
          %s205 = int_to_ptr.vmem [resolvable:$true] %s204
          %210 = dma.hbm_to_vmem [thread:$0]  %s2, 256, %s205, [#allocation6], 64, 64, 4
        $region16: #{tpu_custom_call.1} parent=11 // pred_fallthru
          _
        // Predicated region
        $region17: #{tpu_custom_call.1} parent=11 // pred_check
          %p211 = pneg %p115
        $region18: #{tpu_custom_call.1} parent=11 // pred_check_branch
          %213 = sbr.rel (%p211) target = $region20
        $region19: #{tpu_custom_call.1} parent=11 // pred_region
          _
        $region20: #{tpu_custom_call.1} parent=11 // pred_fallthru
          _
        // Predicated region
        $region21: #{tpu_custom_call.1} parent=11 // pred_check
          %p214 = pneg %p136
        $region22: #{tpu_custom_call.1} parent=11 // pred_check_branch
          %216 = sbr.rel (%p214) target = $region24
        $region23: #{tpu_custom_call.1} parent=11 // pred_region
          _
        $region24: #{tpu_custom_call.1} parent=11 // pred_fallthru
          _
        // Predicated region
        $region25: #{tpu_custom_call.1} parent=11 // pred_check
          %p217 = pneg %p157
        $region26: #{tpu_custom_call.1} parent=11 // pred_check_branch
          %219 = sbr.rel (%p217) target = $region28
        $region27: #{tpu_custom_call.1} parent=11 // pred_region
          _
        $region28: #{tpu_custom_call.1} parent=11 // pred_fallthru
          _
      $region12: #{tpu_custom_call.1} parent=5 // pred_fallthru
        _
      %p220 = scmp.lt.s32.totalorder %s21, 2
      // Predicated region
      $region29: #{tpu_custom_call.1} parent=5 // pred_check
        %p221 = pneg %p220
      $region30: #{tpu_custom_call.1} parent=5 // pred_check_branch
        %223 = sbr.rel (%p221) target = $region32
      $region31: #{tpu_custom_call.1} parent=5 // pred_region
        // Predicated region
        $region33: #{tpu_custom_call.1} parent=31 // pred_check
          %p224 = pneg %p41
        $region34: #{tpu_custom_call.1} parent=31 // pred_check_branch
          %226 = sbr.rel (%p224) target = $region36
        $region35: #{tpu_custom_call.1} parent=31 // pred_region
          %s227 = sand.u32 %s31, 1
          %s228 = scalar_lea.sflag [#allocation3], %s227
          %s229 = sand.u32 %s31, 1
          %s230 = smul.addr %s229, 8
          %s231 = scalar_lea.vmem [#allocation2], %s230
          %s233 = ssub.s32 128, 128
          %234 = vsyncadd %s228, %s233
          %s235 = smul.addr %s21, 128
          %s236 = scalar_lea.hbm %s0, %s235
          %s238 = sshll.u32 %s231, 4
          %s239 = int_to_ptr.vmem [resolvable:$true] %s238
          %241 = dma.hbm_to_vmem [thread:$0]  %s236, 128, %s239, %s228
        $region36: #{tpu_custom_call.1} parent=31 // pred_fallthru
          _
        // Predicated region
        $region37: #{tpu_custom_call.1} parent=31 // pred_check
          %p242 = pneg %p67
        $region38: #{tpu_custom_call.1} parent=31 // pred_check_branch
          %244 = sbr.rel (%p242) target = $region40
        $region39: #{tpu_custom_call.1} parent=31 // pred_region
          %s245 = sand.u32 %s21, 1
          %s246 = scalar_lea.sflag [#allocation6], %s245
          %s247 = sand.u32 %s57, 1
          %s248 = smul.addr %s247, 8
          %s249 = scalar_lea.vmem [#allocation5], %s248
          %s251 = ssub.s32 128, 128
          %252 = vsyncadd %s246, %s251
          %s253 = smul.addr %s21, 128
          %s254 = scalar_lea.hbm %s1, %s253
          %s256 = sshll.u32 %s249, 4
          %s257 = int_to_ptr.vmem [resolvable:$true] %s256
          %259 = dma.hbm_to_vmem [thread:$0]  %s254, 128, %s257, %s246
        $region40: #{tpu_custom_call.1} parent=31 // pred_fallthru
          _
      $region32: #{tpu_custom_call.1} parent=5 // pred_fallthru
        _
      %p260 = scmp.le.s32.totalorder 1, %s21
      %p261 = scmp.lt.s32.totalorder %s21, 3
      %p262 = pnand %p260, %p261
      %p263 = pneg %p262
      // Predicated region
      $region41: #{tpu_custom_call.1} parent=5 // pred_check
        _
      $region42: #{tpu_custom_call.1} parent=5 // pred_check_branch
        %265 = sbr.rel (%p262) target = $region44
      $region43: #{tpu_custom_call.1} parent=5 // pred_region
        %s266 = ssub.s32 %s21, 1
        %s267 = sand.u32 %s34, 1
        %s268 = scalar_lea.sflag [#allocation3], %s267
        %s269 = sand.u32 %s34, 1
        %s270 = smul.addr %s269, 8
        %s271 = scalar_lea.vmem [#allocation2], %s270
        // Predicated region
        $region45: #{tpu_custom_call.1} parent=43 // pred_check
          %p272 = pneg %p47
        $region46: #{tpu_custom_call.1} parent=43 // pred_check_branch
          %274 = sbr.rel (%p272) target = $region48
        $region47: #{tpu_custom_call.1} parent=43 // pred_region
          %275 = dma.done %s268, 128
        $region48: #{tpu_custom_call.1} parent=43 // pred_fallthru
          _
        %s276 = sand.u32 %s26, 1
        %s277 = scalar_lea.sflag [#allocation6], %s276
        %s278 = sand.u32 %s60, 1
        %s279 = smul.addr %s278, 8
        %s280 = scalar_lea.vmem [#allocation5], %s279
        // Predicated region
        $region49: #{tpu_custom_call.1} parent=43 // pred_check
          %p281 = pneg %p73
        $region50: #{tpu_custom_call.1} parent=43 // pred_check_branch
          %283 = sbr.rel (%p281) target = $region52
        $region51: #{tpu_custom_call.1} parent=43 // pred_region
          %284 = dma.done %s277, 128
        $region52: #{tpu_custom_call.1} parent=43 // pred_fallthru
          _
        // Predicated region
        $region53: #{tpu_custom_call.1} parent=43 // pred_check
          %p285 = pneg %p94
        $region54: #{tpu_custom_call.1} parent=43 // pred_check_branch
          %287 = sbr.rel (%p285) target = $region56
        $region55: #{tpu_custom_call.1} parent=43 // pred_region
          %288 = dma.done [#allocation6], 256
        $region56: #{tpu_custom_call.1} parent=43 // pred_fallthru
          _
        %s289 = sand.u32 %s34, 1
        %s290 = scalar_lea.sflag [#allocation3], %s289
        %s291 = sand.u32 %s34, 1
        %s292 = smul.addr %s291, 8
        %s293 = scalar_lea.vmem [#allocation2], %s292
        %p294 = pneg %p47
        %p295 = pneg %p44
        %s296 = sand.u32 %s26, 1
        %s297 = scalar_lea.sflag [#allocation6], %s296
        %s298 = sand.u32 %s60, 1
        %s299 = smul.addr %s298, 8
        %s300 = scalar_lea.vmem [#allocation5], %s299
        %p301 = pneg %p73
        %p302 = pneg %p70
        %p303 = pneg %p94
        %p304 = pneg %p91
        %p305 = pneg %p115
        %p306 = pneg %p112
        %p307 = pneg %p136
        %p308 = pneg %p133
        %p309 = pneg %p157
        %p310 = pneg %p154
        %p311 = pneg %p183
        %p312 = pneg %p180
        %s313 = sand.u32 %s170, 1
        %s314 = scalar_lea.sflag [#allocation4], %s313
        %s315 = sand.u32 %s170, 1
        %s316 = smul.addr %s315, 8
        %s317 = scalar_lea.vmem [#allocation8], %s316
        %v319 = vld [vmem:[%s271] sm:$0xff]
        %v320 = vpack.c.bf16 %v319, %v319
        %v321 = vld [vmem:[#allocation7] sm:$0xf]
        %v322 = vld [vmem:[#allocation7 + $0x4] sm:$0xf]
        %v323 = vld [vmem:[#allocation7 + $0x8] sm:$0xf]
        %v324 = vld [vmem:[#allocation7 + $0xc] sm:$0xf]
        %v325 = vld [vmem:[%s3] sm:$0x1]
        %v327 = vlaneseq
        %v328 = vshrl.u32 %v327, 7
        %v329 = vsub.s32 0, %v328
        %v330 = vrot.slane %v325, %v329
        %v336 = vunpack.c.l.b16 %v321
        %v337 = vunpack.c.l.b16 %v322
        %v338 = vunpack.c.l.b16 %v323
        %v339 = vunpack.c.l.b16 %v324
        %v340 = vpack.c.b16 %v337, %v336
        %v341 = vpack.c.b16 %v339, %v338
        %vm344 = vcmask 261120
        %v346 = vsel %vm344, %v320, 0
        %348 = vmatprep.subr.bf16.mxu0 0
        %349 = vmatpush1.bf16.msra.mxu0 0
        %350 = vmatprep.subr.bf16.mxu0 0
        %351 = vmatpush1.bf16.msra.mxu0 0
        %352 = vmatprep.subr.bf16.mxu0 0
        %353 = vmatpush1.bf16.msra.mxu0 0
        %354 = vmatprep.subr.bf16.mxu0 0
        %355 = vmatpush1.bf16.msra.mxu0 0
        %356 = vmatprep.subr.bf16.mxu0 0
        %357 = vmatpush1.bf16.msra.mxu0 0
        %358 = vmatprep.subr.bf16.mxu0 0
        %359 = vmatpush1.bf16.msra.mxu0 0
        %360 = vmatprep.subr.bf16.mxu0 0
        %361 = vmatpush1.bf16.msra.mxu0 %v341
        %362 = vmatprep.subr.bf16.mxu0 0
        %363 = vmatpush1.bf16.msra.mxu0 %v340
        %364 = vmatprep.subr.bf16.mxu0 0
        %365 = vmatpush2.bf16.msra.mxu0 0
        %366 = vmatprep.subr.bf16.mxu0 0
        %367 = vmatpush2.bf16.msra.mxu0 0
        %368 = vmatprep.subr.bf16.mxu0 0
        %369 = vmatpush2.bf16.msra.mxu0 0
        %370 = vmatprep.subr.bf16.mxu0 0
        %371 = vmatpush2.bf16.msra.mxu0 0
        %372 = vmatprep.subr.bf16.mxu0 0
        %373 = vmatpush2.bf16.msra.mxu0 0
        %374 = vmatprep.subr.bf16.mxu0 0
        %375 = vmatpush2.bf16.msra.mxu0 0
        %376 = vmatprep.subr.bf16.mxu0 0
        %377 = vmatpush2.bf16.msra.mxu0 0
        %378 = vmatprep.subr.bf16.mxu0 0
        %379 = vmatpush2.bf16.msra.mxu0 0
        %380 = vmatprep.mubr.bf16.mxu0 0
        %381 = vmatmul.mubr.bf16.gmra.mxu0 %v346
        %v382 = vpop.f32.mrf.mxu0
        %v383 = vadd.f32 %v330, %v382
        %v384 = vpop.f32.mrf.mxu0
        %v385 = vpop.f32.mrf.mxu0
        %v386 = vpop.f32.mrf.mxu0
        %387 = vdwg.mxu0
        %v388 = vld [vmem:[%s280] sm:$0xff]
        %v389 = vadd.f32 %v383, %v388
        %v390 = vsel %vm344, %v389, 0.0
        %391 = vadd.xlane.f32.xlu0 %v390
        %v392 = vpop.xlane.xlu0 %391
        %v393 = vmul.f32 %v389, %v389
        %v394 = vsel %vm344, %v393, 0.0
        %395 = vadd.xlane.f32.xlu0 %v394
        %v396 = vpop.xlane.xlu0 %395
        %v397 = vmul.f32 %v392, 0.03125
        %v398 = vmul.f32 %v396, 0.03125
        %v399 = vmul.f32 %v397, %v397
        %v400 = vsub.f32 %v398, %v399
        %v401 = vmax.f32 %v400, 0.0
        %v402 = vadd.f32 %v401, 1e-12
        %v403 = vrsqrt.pop %v402
        %v404 = vsub.f32 %v389, %v397
        %v405 = vmul.f32 %v404, %v403
        %v406 = vld [vmem:[%s4] sm:$0x1]
        %v408 = vlaneseq
        %v409 = vshrl.u32 %v408, 7
        %v410 = vsub.s32 0, %v409
        %v411 = vrot.slane %v406, %v410
        %v413 = vmul.f32 %v405, %v411
        %v414 = vld [vmem:[%s5] sm:$0x1]
        %v416 = vlaneseq
        %v417 = vshrl.u32 %v416, 7
        %v418 = vsub.s32 0, %v417
        %v419 = vrot.slane %v414, %v418
        %v421 = vadd.f32 %v413, %v419
        %422 = vst.msk [vmem:[%s317] sm:$0xff] %vm344, %v421
        %s423 = sand.u32 %s170, 1
        %s424 = scalar_lea.sflag [#allocation4], %s423
        %s425 = sand.u32 %s170, 1
        %s426 = smul.addr %s425, 8
        %s427 = scalar_lea.vmem [#allocation8], %s426
        // Predicated region
        $region57: #{tpu_custom_call.1} parent=43 // pred_check
          %p428 = pneg %p180
        $region58: #{tpu_custom_call.1} parent=43 // pred_check_branch
          %430 = sbr.rel (%p428) target = $region60
        $region59: #{tpu_custom_call.1} parent=43 // pred_region
          %s432 = ssub.s32 128, 128
          %433 = vsyncadd %s424, %s432
          %s434 = smul.addr %s26, 128
          %s435 = scalar_lea.hbm %s6, %s434
          %s437 = sshll.u32 %s427, 4
          %s438 = int_to_ptr.vmem [resolvable:$true] %s437
          %440 = dma.vmem_to_hbm [thread:$0]  %s438, 128, %s435, %s424
        $region60: #{tpu_custom_call.1} parent=43 // pred_fallthru
          _
      $region44: #{tpu_custom_call.1} parent=5 // pred_fallthru
        _
      %p441 = scmp.le.s32.totalorder 2, %s21
      // Predicated region
      $region61: #{tpu_custom_call.1} parent=5 // pred_check
        %p442 = pneg %p441
      $region62: #{tpu_custom_call.1} parent=5 // pred_check_branch
        %444 = sbr.rel (%p442) target = $region64
      $region63: #{tpu_custom_call.1} parent=5 // pred_region
        %s445 = ssub.s32 %s21, 2
        // Predicated region
        $region65: #{tpu_custom_call.1} parent=63 // pred_check
          %p446 = pneg %p186
        $region66: #{tpu_custom_call.1} parent=63 // pred_check_branch
          %448 = sbr.rel (%p446) target = $region68
        $region67: #{tpu_custom_call.1} parent=63 // pred_region
          %s449 = sand.u32 %s171, 1
          %s450 = scalar_lea.sflag [#allocation4], %s449
          %s451 = sand.u32 %s171, 1
          %s452 = smul.addr %s451, 8
          %s453 = scalar_lea.vmem [#allocation8], %s452
          %454 = dma.done %s450, 128
        $region68: #{tpu_custom_call.1} parent=63 // pred_fallthru
          _
      $region64: #{tpu_custom_call.1} parent=5 // pred_fallthru
        _
    $region6: #{tpu_custom_call.1} parent=1 // loop_footer
      %s25 = sadd.s32 1, %s21
    $region7: #{tpu_custom_call.1} parent=1 // loop_footer_branch
      %20 = sbr.rel target = $region3
    $region8: #{tpu_custom_call.1} parent=1 // loop_exit
      _
    %455 = vsyncpa [#allocation3], 1
    %s456 = scalar_lea.sflag [#allocation3], 1
    %457 = vsyncpa %s456, 1
    %458 = vsyncpa [#allocation6], 1
    %s459 = scalar_lea.sflag [#allocation6], 1
    %460 = vsyncpa %s459, 1
    %461 = vsyncpa [#allocation4], 1
    %s462 = scalar_lea.sflag [#allocation4], 1
    %463 = vsyncpa %s462, 1

</llo_original>
